<compile_context>
chip_gen: v6e
topology: v6e:2x2x1
jax: 0.10.0
libtpu: 0.0.40
codegen_flags: <defaults>
</compile_context>

<pallas_src>
import functools

import jax
import jax.numpy as jnp
from jax.experimental import pallas as pl
from jax.experimental.pallas import tpu as pltpu


def _round_up(n, m):
    return ((n + m - 1) // m) * m


def linear_fm_kernel(wb_ref, x_ref, o_ref):
    """One lane/sublane-dense tile: x_ref (3, TR, 128) -> o_ref (2, TR, 128).

    wb_ref is an SMEM vector of 8 scalars
      [w00, w01, w10, w11, w20, w21, b0, b1]
    with w[i, j] = pre-transposed weight (in-feature i, out-feature j), so
      y[j] = w0j*x0 + w1j*x1 + w2j*x2 + bj   -- six full-width VPU FMAs.
    """
    x0 = x_ref[0]
    x1 = x_ref[1]
    x2 = x_ref[2]
    o_ref[0] = (wb_ref[0] * x0 + wb_ref[2] * x1 + wb_ref[4] * x2
                + wb_ref[6]).astype(o_ref.dtype)
    o_ref[1] = (wb_ref[1] * x0 + wb_ref[3] * x1 + wb_ref[5] * x2
                + wb_ref[7]).astype(o_ref.dtype)


@functools.partial(jax.jit, static_argnames=("rows_per_step",))
def linear_fm_pallas(xt, w_t, b, *, rows_per_step=1024):
    """Feature-major Linear(3, 2): xt (3, B) -> (2, B).

    Zero extra HBM passes when B % 128 == 0 (reshapes are free); otherwise the
    batch is padded only up to the next multiple of 128.
    """
    K, B = xt.shape
    N = w_t.shape[1]

    Bp = _round_up(B, 128)
    if Bp != B:
        xt = jnp.pad(xt, ((0, 0), (0, Bp - B)))
    R = Bp // 128                       # number of 128-lane rows
    xr = xt.reshape(K, R, 128)          # free contiguous reshape

    # Rows per grid step: multiple of 8 (f32 sublane granule), capped for VMEM,
    # and small enough that the grid has >= 2 steps (v7x megacore) when R > 8.
    if R <= 8:
        tr = R                          # full-extent block (allowed even if not %8)
    else:
        tr = _round_up(min(max(rows_per_step, 8), 4096), 8)
        tr = min(tr, _round_up((R + 1) // 2, 8))
    grid = (pl.cdiv(R, tr),)

    # Weights + bias as 8 scalars in SMEM (loaded once, no per-tile re-DMA).
    wb = jnp.concatenate([w_t.reshape(-1), b.reshape(-1)]).astype(jnp.float32)

    yr = pl.pallas_call(
        linear_fm_kernel,
        out_shape=jax.ShapeDtypeStruct((N, R, 128), xt.dtype),
        grid=grid,
        in_specs=[
            pl.BlockSpec(memory_space=pltpu.MemorySpace.SMEM),      # wb scalars
            pl.BlockSpec((K, tr, 128), lambda i: (0, i, 0)),        # x slab
        ],
        out_specs=pl.BlockSpec((N, tr, 128), lambda i: (0, i, 0)),  # y slab
        compiler_params=pltpu.CompilerParams(
            dimension_semantics=("parallel",),   # independent tiles -> both TCs
            vmem_limit_bytes=32 * 1024 * 1024,
        ),
    )(wb, xr)

    yt = yr.reshape(N, Bp)
    if Bp != B:
        yt = yt[:, :B]
    return yt


@functools.partial(jax.jit, static_argnames=("use_pallas", "rows_per_step"))
def foo_forward(x, w_t, b, *, use_pallas=False, rows_per_step=1024):
    """PyTorch Foo.forward semantics: y = x @ W^T + b for x of shape (..., 3).

    Per the perf review, natural row-major input is best served by the fused
    XLA op (one ~20 B/elem pass); the Pallas kernel is for feature-major
    producers/consumers. use_pallas=True forces the Pallas path (adds the
    transpose plumbing) — mainly for testing the kernel from natural layout.
    """
    if not use_pallas:
        return x @ w_t + b
    lead = x.shape[:-1]
    xt = x.reshape(-1, x.shape[-1]).T                     # (3, B)
    yt = linear_fm_pallas(xt, w_t, b, rows_per_step=rows_per_step)
    return yt.T.reshape(*lead, w_t.shape[1])


def init_linear_params(key, in_features=3, out_features=2, dtype=jnp.float32):
    # Mirrors nn.Linear's uniform(-1/sqrt(fan_in), +1/sqrt(fan_in)) init.
    kw, kb = jax.random.split(key)
    bound = 1.0 / jnp.sqrt(jnp.float32(in_features))
    # PyTorch weight is (out, in); store the transpose (in, out) for the kernel.
    w_t = jax.random.uniform(kw, (in_features, out_features), dtype,
                             minval=-bound, maxval=bound)
    b = jax.random.uniform(kb, (out_features,), dtype,
                           minval=-bound, maxval=bound)
    return w_t, b


def _reference(x, w_t, b):
    return jnp.dot(x, w_t, precision=jax.lax.Precision.HIGHEST) + b


if __name__ == "__main__":
    key = jax.random.PRNGKey(0)
    kx1, kx2, kp = jax.random.split(key, 3)
    w_t, b = init_linear_params(kp)

    # Feature-major kernel path: (3, B) -> (2, B). B=2048 -> R=16 row-tiles
    # -> 2 pipelined grid steps, no padding, no wrapper-side copies.
    B = 2048
    xt = jax.random.normal(kx1, (3, B), dtype=jnp.float32)
    yt = linear_fm_pallas(xt, w_t, b)
    jax.block_until_ready(yt)
    ref_fm = _reference(xt.T, w_t, b).T
    assert yt.shape == (2, B)
    assert jnp.allclose(yt, ref_fm, atol=1e-5, rtol=1e-5)

    # Natural-layout module semantics on a tiny batch (exercises the
    # pad-to-128 ragged path through the same kernel).
    x = jax.random.normal(kx2, (8, 3), dtype=jnp.float32)
    y = foo_forward(x, w_t, b, use_pallas=True)
    jax.block_until_ready(y)
    ref = _reference(x, w_t, b)
    assert y.shape == (8, 2)
    assert jnp.allclose(y, ref, atol=1e-5, rtol=1e-5)

    print("KERNEL_OK")
</pallas_src>

<mosaic_0001>
module attributes {stable_mosaic.version = 11 : i64} {
  func.func @linear_fm_kernel(%arg0: i32, %arg1: memref<8xf32, #tpu.memory_space<smem>>, %arg2: memref<3x8x128xf32, #tpu.memory_space<vmem>>, %arg3: memref<2x8x128xf32, #tpu.memory_space<vmem>>) attributes {dimension_semantics = [#tpu.dimension_semantics<parallel>], iteration_bounds = array<i64: 2>, scalar_prefetch = 0 : i64, scratch_operands = 0 : i64, tpu.core_type = #tpu.core_type<tc>, window_params = [{transform_indices = @transform_0, window_bounds = array<i64: 8>}, {transform_indices = @transform_1, window_bounds = array<i64: 3, 8, 128>}, {transform_indices = @transform_2, window_bounds = array<i64: 2, 8, 128>}]} {
    %c0 = arith.constant 0 : index
    %c0_0 = arith.constant 0 : index
    %c0_1 = arith.constant 0 : index
    %0 = vector.load %arg2[%c0, %c0_0, %c0_1] : memref<3x8x128xf32, #tpu.memory_space<vmem>>, vector<1x8x128xf32>
    %1 = vector.shape_cast %0 : vector<1x8x128xf32> to vector<8x128xf32>
    %c1 = arith.constant 1 : index
    %c0_2 = arith.constant 0 : index
    %c0_3 = arith.constant 0 : index
    %2 = vector.load %arg2[%c1, %c0_2, %c0_3] : memref<3x8x128xf32, #tpu.memory_space<vmem>>, vector<1x8x128xf32>
    %3 = vector.shape_cast %2 : vector<1x8x128xf32> to vector<8x128xf32>
    %c2 = arith.constant 2 : index
    %c0_4 = arith.constant 0 : index
    %c0_5 = arith.constant 0 : index
    %4 = vector.load %arg2[%c2, %c0_4, %c0_5] : memref<3x8x128xf32, #tpu.memory_space<vmem>>, vector<1x8x128xf32>
    %5 = vector.shape_cast %4 : vector<1x8x128xf32> to vector<8x128xf32>
    %c0_6 = arith.constant 0 : index
    %6 = memref.load %arg1[%c0_6] : memref<8xf32, #tpu.memory_space<smem>>
    %7 = vector.broadcast %6 : f32 to vector<8x128xf32>
    %8 = arith.mulf %7, %1 : vector<8x128xf32>
    %c2_7 = arith.constant 2 : index
    %9 = memref.load %arg1[%c2_7] : memref<8xf32, #tpu.memory_space<smem>>
    %10 = vector.broadcast %9 : f32 to vector<8x128xf32>
    %11 = arith.mulf %10, %3 : vector<8x128xf32>
    %12 = arith.addf %8, %11 : vector<8x128xf32>
    %c4 = arith.constant 4 : index
    %13 = memref.load %arg1[%c4] : memref<8xf32, #tpu.memory_space<smem>>
    %14 = vector.broadcast %13 : f32 to vector<8x128xf32>
    %15 = arith.mulf %14, %5 : vector<8x128xf32>
    %16 = arith.addf %12, %15 : vector<8x128xf32>
    %c6 = arith.constant 6 : index
    %17 = memref.load %arg1[%c6] : memref<8xf32, #tpu.memory_space<smem>>
    %18 = vector.broadcast %17 : f32 to vector<8x128xf32>
    %19 = arith.addf %16, %18 : vector<8x128xf32>
    %c0_8 = arith.constant 0 : index
    %c0_9 = arith.constant 0 : index
    %c0_10 = arith.constant 0 : index
    %20 = vector.load %arg3[%c0_8, %c0_9, %c0_10] : memref<2x8x128xf32, #tpu.memory_space<vmem>>, vector<1x8x128xf32>
    %21 = vector.shape_cast %20 : vector<1x8x128xf32> to vector<8x128xf32>
    %22 = vector.shape_cast %19 : vector<8x128xf32> to vector<1x8x128xf32>
    tpu.vector_store %arg3[%c0_8, %c0_9, %c0_10], %22 {strides = array<i32>} : memref<2x8x128xf32, #tpu.memory_space<vmem>>, vector<1x8x128xf32>,
    %c1_11 = arith.constant 1 : index
    %23 = memref.load %arg1[%c1_11] : memref<8xf32, #tpu.memory_space<smem>>
    %24 = vector.broadcast %23 : f32 to vector<8x128xf32>
    %25 = arith.mulf %24, %1 : vector<8x128xf32>
    %c3 = arith.constant 3 : index
    %26 = memref.load %arg1[%c3] : memref<8xf32, #tpu.memory_space<smem>>
    %27 = vector.broadcast %26 : f32 to vector<8x128xf32>
    %28 = arith.mulf %27, %3 : vector<8x128xf32>
    %29 = arith.addf %25, %28 : vector<8x128xf32>
    %c5 = arith.constant 5 : index
    %30 = memref.load %arg1[%c5] : memref<8xf32, #tpu.memory_space<smem>>
    %31 = vector.broadcast %30 : f32 to vector<8x128xf32>
    %32 = arith.mulf %31, %5 : vector<8x128xf32>
    %33 = arith.addf %29, %32 : vector<8x128xf32>
    %c7 = arith.constant 7 : index
    %34 = memref.load %arg1[%c7] : memref<8xf32, #tpu.memory_space<smem>>
    %35 = vector.broadcast %34 : f32 to vector<8x128xf32>
    %36 = arith.addf %33, %35 : vector<8x128xf32>
    %c1_12 = arith.constant 1 : index
    %c0_13 = arith.constant 0 : index
    %c0_14 = arith.constant 0 : index
    %37 = vector.load %arg3[%c1_12, %c0_13, %c0_14] : memref<2x8x128xf32, #tpu.memory_space<vmem>>, vector<1x8x128xf32>
    %38 = vector.shape_cast %37 : vector<1x8x128xf32> to vector<8x128xf32>
    %39 = vector.shape_cast %36 : vector<8x128xf32> to vector<1x8x128xf32>
    tpu.vector_store %arg3[%c1_12, %c0_13, %c0_14], %39 {strides = array<i32>} : memref<2x8x128xf32, #tpu.memory_space<vmem>>, vector<1x8x128xf32>,
    return
  }
  func.func @transform_0(%arg0: i32) -> i32 {
    %c0_i32 = arith.constant 0 : i32
    %c0_i32_0 = arith.constant 0 : i32
    return %c0_i32 : i32
  }
  func.func @transform_1(%arg0: i32) -> (i32, i32, i32) {
    %c0_i32 = arith.constant 0 : i32
    %c0_i32_0 = arith.constant 0 : i32
    %c0_i32_1 = arith.constant 0 : i32
    return %c0_i32, %arg0, %c0_i32_0 : i32, i32, i32
  }
  func.func @transform_2(%arg0: i32) -> (i32, i32, i32) {
    %c0_i32 = arith.constant 0 : i32
    %c0_i32_0 = arith.constant 0 : i32
    %c0_i32_1 = arith.constant 0 : i32
    return %c0_i32, %arg0, %c0_i32_0 : i32, i32, i32
  }
}

</mosaic_0001>

<llo_original>
// kernel: linear_fm_pallas.1
$region0: #{linear_fm_pallas.1}
  #allocation0 [shape = 'u32[]', space=smem, size = 0x4, offset = 0x4, fixed_abs, tag = 'smem constant byte address 0x4 - core index']
  #allocation1 [shape = 'u32[144,128]{1,0:T(1,128)}', space=vmem, size = 0x12000, scoped, tag = 'internal scratch']
  %s0 = inlined_call_operand.vmem [shape: f32[8], index: 0, kind: input, shape index: {}]
  %s1 = inlined_call_operand.vmem [shape: f32[3,16,128], index: 1, kind: input, shape index: {}]
  %s2 = inlined_call_operand.vmem [shape: f32[2,16,128], index: 2, kind: output, shape index: {}]
  %s3 = sld [smem:[#allocation0]]
  $region117: #{linear_fm_pallas.1} parent=0
    _
  %s5 = ssub.s32 1, %s3
  %s6 = scalar_select 0, %s5, %s3
  $region1: #{linear_fm_pallas.1} parent=0
    #allocation2 [shape = 'u8[512]{0}', space=smem, size = 0x200, scoped, tag = 'input window, operand 0, single buffered']
    #allocation3 [shape = 's32[2]{0}', space=sflag, size = 0x8, scoped, tag = 'scoped memory for linear_fm_pallas.1']
    #allocation4 [shape = 'u8[24576]{0}', space=vmem, size = 0x6000, scoped, tag = 'input window, operand 1']
    #allocation5 [shape = 'u8[16384]{0}', space=vmem, size = 0x4000, scoped, tag = 'output window, operand 0']
    %7 = vsyncpa [#allocation3], 0
    loop: start=0, step=1, limit=4
    $region2: #{linear_fm_pallas.1} parent=1 // loop_pre_header
      _
    $region3: #{linear_fm_pallas.1} parent=1 // loop_header
      %s9 = sphi 0, %s13
      %p10 = scmp.ge.s32.totalorder %s9, 4
      %s17 = sphi 0, %s17
      %s19 = sphi 0, %s17
      %s20 = sphi 0, %s19
      %s34 = sphi 0, %s20
      %s40 = sphi 0, %s42
      %s43 = sphi 0, %s40
      %s44 = sphi 0, %s43
      %s60 = sphi 0, %s44
      %s66 = sphi 0, %s68
      %s69 = sphi 0, %s66
      %s70 = sphi 0, %s69
      %s86 = sphi 0, %s70
    $region4: #{linear_fm_pallas.1} parent=1 // loop_header_branch
      %12 = sbr.rel (%p10) target = $region8
    $region5: #{linear_fm_pallas.1} parent=1 // loop_body
      %s14 = ssub.s32 %s9, 1
      %s15 = ssub.s32 %s9, 2
      %s16 = sadd.s32 %s9, 1
      %s18 = sadd.s32 %s17, 1
      %p21 = scmp.eq.s32.totalorder %s9, 1
      %p22 = scmp.ne.s32.totalorder %s17, %s19
      %p23 = scmp.eq.s32.totalorder %s9, 0
      %p24 = por %p22, %p23
      %p25 = scmp.ne.s32.totalorder %s17, %s19
      %p26 = scmp.eq.s32.totalorder %s14, 1
      %p27 = por %p25, %p26
      %p28 = scmp.ne.s32.totalorder %s19, %s20
      %p29 = scmp.eq.s32.totalorder %s14, 0
      %p30 = por %p28, %p29
      %p31 = scmp.ne.s32.totalorder %s19, %s20
      %p32 = scmp.eq.s32.totalorder %s15, 1
      %p33 = por %p31, %p32
      %p35 = scmp.ne.s32.totalorder %s20, %s34
      %p36 = scmp.eq.s32.totalorder %s15, 0
      %p37 = por %p35, %p36
      %s38 = ssub.s32 %s9, %s16
      %p39 = scmp.eq.s32.totalorder %s38, 0
      %s41 = sadd.s32 %s40, 1
      %s42 = scalar_select %p39, %s40, %s41
      %p45 = pneg %p39
      %p46 = scmp.eq.s32.totalorder %s9, 1
      %p47 = por %p45, %p46
      %p48 = scmp.ne.s32.totalorder %s40, %s43
      %p49 = scmp.eq.s32.totalorder %s9, 0
      %p50 = por %p48, %p49
      %p51 = scmp.ne.s32.totalorder %s40, %s43
      %p52 = scmp.eq.s32.totalorder %s14, 1
      %p53 = por %p51, %p52
      %p54 = scmp.ne.s32.totalorder %s43, %s44
      %p55 = scmp.eq.s32.totalorder %s14, 0
      %p56 = por %p54, %p55
      %p57 = scmp.ne.s32.totalorder %s43, %s44
      %p58 = scmp.eq.s32.totalorder %s15, 1
      %p59 = por %p57, %p58
      %p61 = scmp.ne.s32.totalorder %s44, %s60
      %p62 = scmp.eq.s32.totalorder %s15, 0
      %p63 = por %p61, %p62
      %s64 = ssub.s32 %s9, %s16
      %p65 = scmp.eq.s32.totalorder %s64, 0
      %s67 = sadd.s32 %s66, 1
      %s68 = scalar_select %p65, %s66, %s67
      %p71 = pneg %p65
      %p72 = scmp.eq.s32.totalorder %s9, 1
      %p73 = por %p71, %p72
      %p74 = scmp.ne.s32.totalorder %s66, %s69
      %p75 = scmp.eq.s32.totalorder %s9, 0
      %p76 = por %p74, %p75
      %p77 = scmp.ne.s32.totalorder %s66, %s69
      %p78 = scmp.eq.s32.totalorder %s14, 1
      %p79 = por %p77, %p78
      %p80 = scmp.ne.s32.totalorder %s69, %s70
      %p81 = scmp.eq.s32.totalorder %s14, 0
      %p82 = por %p80, %p81
      %p83 = scmp.ne.s32.totalorder %s69, %s70
      %p84 = scmp.eq.s32.totalorder %s15, 1
      %p85 = por %p83, %p84
      %p87 = scmp.ne.s32.totalorder %s70, %s86
      %p88 = scmp.eq.s32.totalorder %s15, 0
      %p89 = por %p87, %p88
      %p90 = scmp.le.s32.totalorder 1, %s9
      %p91 = scmp.lt.s32.totalorder %s9, 3
      %p92 = pnand %p90, %p91
      %p93 = pneg %p92
      // Predicated region
      $region9: #{linear_fm_pallas.1} parent=5 // pred_check
        _
      $region10: #{linear_fm_pallas.1} parent=5 // pred_check_branch
        %95 = sbr.rel (%p92) target = $region12
      $region11: #{linear_fm_pallas.1} parent=5 // pred_region
        %s96 = ssub.s32 %s9, 1
        // Predicated region
        $region13: #{linear_fm_pallas.1} parent=11 // pred_check
          %p97 = pneg %p30
        $region14: #{linear_fm_pallas.1} parent=11 // pred_check_branch
          %99 = sbr.rel (%p97) target = $region16
        $region15: #{linear_fm_pallas.1} parent=11 // pred_region
          %s101 = ssub.s32 16, 16
          %102 = vsyncadd [#allocation3], %s101
          %s104 = sshll.u32 %s0, 4
          %s105 = int_to_ptr.vmem [resolvable:$true] %s104
          %107 = dma.vmem_to_smem %s105, 16, [#allocation2], [#allocation3]
        $region16: #{linear_fm_pallas.1} parent=11 // pred_fallthru
          _
      $region12: #{linear_fm_pallas.1} parent=5 // pred_fallthru
        _
      %p108 = scmp.lt.s32.totalorder %s9, 2
      // Predicated region
      $region17: #{linear_fm_pallas.1} parent=5 // pred_check
        %p109 = pneg %p108
      $region18: #{linear_fm_pallas.1} parent=5 // pred_check_branch
        %111 = sbr.rel (%p109) target = $region20
      $region19: #{linear_fm_pallas.1} parent=5 // pred_region
        // Predicated region
        $region21: #{linear_fm_pallas.1} parent=19 // pred_check
          %p112 = pneg %p50
        $region22: #{linear_fm_pallas.1} parent=19 // pred_check_branch
          %114 = sbr.rel (%p112) target = $region24
        $region23: #{linear_fm_pallas.1} parent=19 // pred_region
          %s115 = sand.u32 %s40, 1
          %s116 = sand.u32 %s40, 1
          %s117 = smul.addr %s116, 24
          %s118 = scalar_lea.vmem [#allocation4], %s117
          %s119 = smul.addr %s9, 8
          %s120 = scalar_lea.vmem %s1, %s119
          // Predicated region
          $region25: #{linear_fm_pallas.1} parent=23 // pred_check
            _
          $region26: #{linear_fm_pallas.1} parent=23 // pred_check_branch
            %122 = sbr.rel (0) target = $region28
          $region27: #{linear_fm_pallas.1} parent=23 // pred_region
            // Predicated region
            $region29: #{linear_fm_pallas.1} parent=27 // pred_check
              _
            $region30: #{linear_fm_pallas.1} parent=27 // pred_check_branch
              %124 = sbr.rel (0) target = $region32
            $region31: #{linear_fm_pallas.1} parent=27 // pred_region
              // Predicated region
              $region44: #{linear_fm_pallas.1} parent=31 // pred_check
                _
              $region45: #{linear_fm_pallas.1} parent=31 // pred_check_branch
                %144 = sbr.rel (0) target = $region47
              $region46: #{linear_fm_pallas.1} parent=31 // pred_region
                loop: start=0, step=1, limit=1
                $region48: #{linear_fm_pallas.1} parent=46 // loop_pre_header
                  _
                $region49: #{linear_fm_pallas.1} parent=46 // loop_header
                  %s146 = sphi 0, %s150
                  %p147 = scmp.ge.s32.totalorder %s146, 1
                  %s151 = sphi %s120, %s120
                  %s152 = sphi %s118, %s118
                $region50: #{linear_fm_pallas.1} parent=46 // loop_header_branch
                  %149 = sbr.rel (%p147) target = $region54
                $region51: #{linear_fm_pallas.1} parent=46 // loop_body
                  %v153 = vld [vmem:[%s151] sm:$0xff]
                  %154 = vst [vmem:[%s152] sm:$0xff] %v153
                  %v155 = vld [vmem:[%s151 + $0x10] sm:$0xff]
                  %156 = vst [vmem:[%s152 + $0x8] sm:$0xff] %v155
                  %v157 = vld [vmem:[%s151 + $0x20] sm:$0xff]
                  %158 = vst [vmem:[%s152 + $0x10] sm:$0xff] %v157
                $region52: #{linear_fm_pallas.1} parent=46 // loop_footer
                  %s150 = sadd.s32 1, %s146
                $region53: #{linear_fm_pallas.1} parent=46 // loop_footer_branch
                  %145 = sbr.rel target = $region49
                $region54: #{linear_fm_pallas.1} parent=46 // loop_exit
                  _
              $region47: #{linear_fm_pallas.1} parent=31 // pred_fallthru
                _
              // Predicated region
              $region55: #{linear_fm_pallas.1} parent=31 // pred_check
                _
              $region56: #{linear_fm_pallas.1} parent=31 // pred_check_branch
                %160 = sbr.rel target = $region58
              $region57: #{linear_fm_pallas.1} parent=31 // pred_region
                _
              $region58: #{linear_fm_pallas.1} parent=31 // pred_fallthru
                _
            $region32: #{linear_fm_pallas.1} parent=27 // pred_fallthru
              _
            // Predicated region
            $region33: #{linear_fm_pallas.1} parent=27 // pred_check
              _
            $region34: #{linear_fm_pallas.1} parent=27 // pred_check_branch
              %126 = sbr.rel target = $region36
            $region35: #{linear_fm_pallas.1} parent=27 // pred_region
              %s128 = ssub.s32 256, 1
              loop: start=0, step=1, limit=1
              $region37: #{linear_fm_pallas.1} parent=35 // loop_pre_header
                _
              $region38: #{linear_fm_pallas.1} parent=35 // loop_header
                %s130 = sphi 0, %s134
                %p131 = scmp.ge.s32.totalorder %s130, 1
                %s135 = sphi %s120, %s120
                %s136 = sphi %s118, %s118
              $region39: #{linear_fm_pallas.1} parent=35 // loop_header_branch
                %133 = sbr.rel (%p131) target = $region43
              $region40: #{linear_fm_pallas.1} parent=35 // loop_body
                %v137 = vld [vmem:[%s135] sm:%s128]
                %138 = vst [vmem:[%s136] sm:%s128] %v137
                %v139 = vld [vmem:[%s135 + $0x10] sm:%s128]
                %140 = vst [vmem:[%s136 + $0x8] sm:%s128] %v139
                %v141 = vld [vmem:[%s135 + $0x20] sm:%s128]
                %142 = vst [vmem:[%s136 + $0x10] sm:%s128] %v141
              $region41: #{linear_fm_pallas.1} parent=35 // loop_footer
                %s134 = sadd.s32 1, %s130
              $region42: #{linear_fm_pallas.1} parent=35 // loop_footer_branch
                %129 = sbr.rel target = $region38
              $region43: #{linear_fm_pallas.1} parent=35 // loop_exit
                _
            $region36: #{linear_fm_pallas.1} parent=27 // pred_fallthru
              _
          $region28: #{linear_fm_pallas.1} parent=23 // pred_fallthru
            _
          %161 = vnop
        $region24: #{linear_fm_pallas.1} parent=19 // pred_fallthru
          _
      $region20: #{linear_fm_pallas.1} parent=5 // pred_fallthru
        _
      %p162 = scmp.le.s32.totalorder 1, %s9
      %p163 = scmp.lt.s32.totalorder %s9, 3
      %p164 = pnand %p162, %p163
      %p165 = pneg %p164
      // Predicated region
      $region59: #{linear_fm_pallas.1} parent=5 // pred_check
        _
      $region60: #{linear_fm_pallas.1} parent=5 // pred_check_branch
        %167 = sbr.rel (%p164) target = $region62
      $region61: #{linear_fm_pallas.1} parent=5 // pred_region
        %s168 = ssub.s32 %s9, 1
        // Predicated region
        $region63: #{linear_fm_pallas.1} parent=61 // pred_check
          %p169 = pneg %p30
        $region64: #{linear_fm_pallas.1} parent=61 // pred_check_branch
          %171 = sbr.rel (%p169) target = $region66
        $region65: #{linear_fm_pallas.1} parent=61 // pred_region
          %172 = dma.done [#allocation3], 16
        $region66: #{linear_fm_pallas.1} parent=61 // pred_fallthru
          _
        %s173 = sand.u32 %s43, 1
        %s174 = sand.u32 %s43, 1
        %s175 = smul.addr %s174, 24
        %s176 = scalar_lea.vmem [#allocation4], %s175
        // Predicated region
        $region67: #{linear_fm_pallas.1} parent=61 // pred_check
          %p177 = pneg %p56
        $region68: #{linear_fm_pallas.1} parent=61 // pred_check_branch
          %179 = sbr.rel (%p177) target = $region70
        $region69: #{linear_fm_pallas.1} parent=61 // pred_region
          _
        $region70: #{linear_fm_pallas.1} parent=61 // pred_fallthru
          _
        %180 = sfence
        %p181 = pneg %p30
        %p182 = pneg %p27
        %s183 = sand.u32 %s43, 1
        %s184 = sand.u32 %s43, 1
        %s185 = smul.addr %s184, 24
        %s186 = scalar_lea.vmem [#allocation4], %s185
        %p187 = pneg %p56
        %p188 = pneg %p53
        %p189 = pneg %p82
        %p190 = pneg %p79
        %s191 = sand.u32 %s69, 1
        %s192 = sand.u32 %s69, 1
        %s193 = smul.addr %s192, 16
        %s194 = scalar_lea.vmem [#allocation5], %s193
        %v195 = vld [vmem:[%s176] sm:$0xff]
        %s196 = scalar_lea.vmem %s176, 8 [#allocation4]
        %v197 = vld [vmem:[%s196] sm:$0xff]
        %s198 = scalar_lea.vmem %s176, 16 [#allocation4]
        %v199 = vld [vmem:[%s198] sm:$0xff]
        %s200 = sld [smem:[#allocation2]]
        %v201 = vstv %s200
        %v202 = vmul.f32 %v201, %v195
        %s203 = sld [smem:[#allocation2 + $0x2]]
        %v204 = vstv %s203
        %v205 = vmul.f32 %v204, %v197
        %v206 = vadd.f32 %v202, %v205
        %s207 = sld [smem:[#allocation2 + $0x4]]
        %v208 = vstv %s207
        %v209 = vmul.f32 %v208, %v199
        %v210 = vadd.f32 %v206, %v209
        %s211 = sld [smem:[#allocation2 + $0x6]]
        %v212 = vstv %s211
        %v213 = vadd.f32 %v210, %v212
        %214 = vst [vmem:[%s194] sm:$0xff] %v213
        %s215 = sld [smem:[#allocation2 + $0x1]]
        %v216 = vstv %s215
        %v217 = vmul.f32 %v216, %v195
        %s218 = sld [smem:[#allocation2 + $0x3]]
        %v219 = vstv %s218
        %v220 = vmul.f32 %v219, %v197
        %v221 = vadd.f32 %v217, %v220
        %s222 = sld [smem:[#allocation2 + $0x5]]
        %v223 = vstv %s222
        %v224 = vmul.f32 %v223, %v199
        %v225 = vadd.f32 %v221, %v224
        %s226 = sld [smem:[#allocation2 + $0x7]]
        %v227 = vstv %s226
        %v228 = vadd.f32 %v225, %v227
        %s229 = scalar_lea.vmem %s194, 8 [#allocation5]
        %230 = vst [vmem:[%s229] sm:$0xff] %v228
        %s231 = sand.u32 %s69, 1
        %s232 = sand.u32 %s69, 1
        %s233 = smul.addr %s232, 16
        %s234 = scalar_lea.vmem [#allocation5], %s233
        // Predicated region
        $region71: #{linear_fm_pallas.1} parent=61 // pred_check
          %p235 = pneg %p79
        $region72: #{linear_fm_pallas.1} parent=61 // pred_check_branch
          %237 = sbr.rel (%p235) target = $region74
        $region73: #{linear_fm_pallas.1} parent=61 // pred_region
          %s238 = smul.addr %s14, 8
          %s239 = scalar_lea.vmem %s2, %s238
          // Predicated region
          $region75: #{linear_fm_pallas.1} parent=73 // pred_check
            _
          $region76: #{linear_fm_pallas.1} parent=73 // pred_check_branch
            %241 = sbr.rel (0) target = $region78
          $region77: #{linear_fm_pallas.1} parent=73 // pred_region
            // Predicated region
            $region79: #{linear_fm_pallas.1} parent=77 // pred_check
              _
            $region80: #{linear_fm_pallas.1} parent=77 // pred_check_branch
              %243 = sbr.rel (0) target = $region82
            $region81: #{linear_fm_pallas.1} parent=77 // pred_region
              // Predicated region
              $region94: #{linear_fm_pallas.1} parent=81 // pred_check
                _
              $region95: #{linear_fm_pallas.1} parent=81 // pred_check_branch
                %261 = sbr.rel (0) target = $region97
              $region96: #{linear_fm_pallas.1} parent=81 // pred_region
                loop: start=0, step=1, limit=1
                $region98: #{linear_fm_pallas.1} parent=96 // loop_pre_header
                  _
                $region99: #{linear_fm_pallas.1} parent=96 // loop_header
                  %s263 = sphi 0, %s267
                  %p264 = scmp.ge.s32.totalorder %s263, 1
                  %s268 = sphi %s234, %s234
                  %s269 = sphi %s239, %s239
                $region100: #{linear_fm_pallas.1} parent=96 // loop_header_branch
                  %266 = sbr.rel (%p264) target = $region104
                $region101: #{linear_fm_pallas.1} parent=96 // loop_body
                  %v270 = vld [vmem:[%s268] sm:$0xff]
                  %271 = vst [vmem:[%s269] sm:$0xff] %v270
                  %v272 = vld [vmem:[%s268 + $0x8] sm:$0xff]
                  %273 = vst [vmem:[%s269 + $0x10] sm:$0xff] %v272
                $region102: #{linear_fm_pallas.1} parent=96 // loop_footer
                  %s267 = sadd.s32 1, %s263
                $region103: #{linear_fm_pallas.1} parent=96 // loop_footer_branch
                  %262 = sbr.rel target = $region99
                $region104: #{linear_fm_pallas.1} parent=96 // loop_exit
                  _
              $region97: #{linear_fm_pallas.1} parent=81 // pred_fallthru
                _
              // Predicated region
              $region105: #{linear_fm_pallas.1} parent=81 // pred_check
                _
              $region106: #{linear_fm_pallas.1} parent=81 // pred_check_branch
                %275 = sbr.rel target = $region108
              $region107: #{linear_fm_pallas.1} parent=81 // pred_region
                _
              $region108: #{linear_fm_pallas.1} parent=81 // pred_fallthru
                _
            $region82: #{linear_fm_pallas.1} parent=77 // pred_fallthru
              _
            // Predicated region
            $region83: #{linear_fm_pallas.1} parent=77 // pred_check
              _
            $region84: #{linear_fm_pallas.1} parent=77 // pred_check_branch
              %245 = sbr.rel target = $region86
            $region85: #{linear_fm_pallas.1} parent=77 // pred_region
              %s247 = ssub.s32 256, 1
              loop: start=0, step=1, limit=1
              $region87: #{linear_fm_pallas.1} parent=85 // loop_pre_header
                _
              $region88: #{linear_fm_pallas.1} parent=85 // loop_header
                %s249 = sphi 0, %s253
                %p250 = scmp.ge.s32.totalorder %s249, 1
                %s254 = sphi %s234, %s234
                %s255 = sphi %s239, %s239
              $region89: #{linear_fm_pallas.1} parent=85 // loop_header_branch
                %252 = sbr.rel (%p250) target = $region93
              $region90: #{linear_fm_pallas.1} parent=85 // loop_body
                %v256 = vld [vmem:[%s254] sm:%s247]
                %257 = vst [vmem:[%s255] sm:%s247] %v256
                %v258 = vld [vmem:[%s254 + $0x8] sm:%s247]
                %259 = vst [vmem:[%s255 + $0x10] sm:%s247] %v258
              $region91: #{linear_fm_pallas.1} parent=85 // loop_footer
                %s253 = sadd.s32 1, %s249
              $region92: #{linear_fm_pallas.1} parent=85 // loop_footer_branch
                %248 = sbr.rel target = $region88
              $region93: #{linear_fm_pallas.1} parent=85 // loop_exit
                _
            $region86: #{linear_fm_pallas.1} parent=77 // pred_fallthru
              _
          $region78: #{linear_fm_pallas.1} parent=73 // pred_fallthru
            _
          %276 = vnop
        $region74: #{linear_fm_pallas.1} parent=61 // pred_fallthru
          _
      $region62: #{linear_fm_pallas.1} parent=5 // pred_fallthru
        _
      %p277 = scmp.le.s32.totalorder 2, %s9
      // Predicated region
      $region109: #{linear_fm_pallas.1} parent=5 // pred_check
        %p278 = pneg %p277
      $region110: #{linear_fm_pallas.1} parent=5 // pred_check_branch
        %280 = sbr.rel (%p278) target = $region112
      $region111: #{linear_fm_pallas.1} parent=5 // pred_region
        %s281 = ssub.s32 %s9, 2
        // Predicated region
        $region113: #{linear_fm_pallas.1} parent=111 // pred_check
          %p282 = pneg %p85
        $region114: #{linear_fm_pallas.1} parent=111 // pred_check_branch
          %284 = sbr.rel (%p282) target = $region116
        $region115: #{linear_fm_pallas.1} parent=111 // pred_region
          %s285 = sand.u32 %s70, 1
          %s286 = sand.u32 %s70, 1
          %s287 = smul.addr %s286, 16
          %s288 = scalar_lea.vmem [#allocation5], %s287
        $region116: #{linear_fm_pallas.1} parent=111 // pred_fallthru
          _
      $region112: #{linear_fm_pallas.1} parent=5 // pred_fallthru
        _
    $region6: #{linear_fm_pallas.1} parent=1 // loop_footer
      %s13 = sadd.s32 1, %s9
    $region7: #{linear_fm_pallas.1} parent=1 // loop_footer_branch
      %8 = sbr.rel target = $region3
    $region8: #{linear_fm_pallas.1} parent=1 // loop_exit
      _
    %289 = vsyncpa [#allocation3], 1
    %s290 = scalar_lea.sflag [#allocation3], 1
    %291 = vsyncpa %s290, 1

</llo_original>
